<compile_context>
chip_gen: v6e
topology: v6e:2x2x1
jax: 0.10.0
libtpu: 0.0.40
codegen_flags: <defaults>
</compile_context>

<pallas_src>
import functools

import jax
import jax.numpy as jnp
from jax.experimental import pallas as pl
from jax.experimental.pallas import tpu as pltpu

LANES = 128
DESIRED_BLOCK_ROWS = 4096   # 4096 * 128 * 4B = 2 MiB per input block
NUM_CORES = 2               # megacore sharding on v7x; no-op cost elsewhere


def _charbonnier_kernel(o_ref, t_ref, out_ref, *, full_rows, rem, block_rows,
                        blocks_per_core, total_blocks, eps2):
    c = pl.program_id(0)          # core / parallel axis
    i = pl.program_id(1)          # reduction axis (arbitrary)

    # Reset this core's per-lane accumulator at the start of its sub-grid.
    @pl.when(i == 0)
    def _():
        out_ref[...] = jnp.zeros_like(out_ref)

    blk = c * blocks_per_core + i  # logical (unclamped) block id

    d = o_ref[...].astype(jnp.float32) - t_ref[...].astype(jnp.float32)
    elem = jnp.sqrt(d * d + jnp.float32(eps2))

    # Fast path: interior block, every element valid -> no mask work.
    @pl.when(blk < total_blocks - 1)
    def _():
        out_ref[...] += jnp.sum(elem, axis=0, keepdims=True)

    # Tail (or redundant, re-read) block: mask out elements whose global flat
    # index is >= n.  Row-based mask avoids int32 overflow for huge inputs.
    @pl.when(blk >= total_blocks - 1)
    def _():
        row0 = blk * block_rows
        row_idx = jax.lax.broadcasted_iota(jnp.int32, (block_rows, LANES), 0)
        col_idx = jax.lax.broadcasted_iota(jnp.int32, (block_rows, LANES), 1)
        grow = row0 + row_idx
        mask = (grow < full_rows) | ((grow == full_rows) & (col_idx < rem))
        masked = jnp.where(mask, elem, jnp.float32(0.0))
        out_ref[...] += jnp.sum(masked, axis=0, keepdims=True)


def charbonnier_loss(outputs, targets, epsilon=1e-6):
    """Equivalent of CharbonnierLoss.forward: mean(sqrt(diff^2 + eps^2))."""
    assert outputs.shape == targets.shape
    n = outputs.size

    o_flat = outputs.reshape(-1)
    t_flat = targets.reshape(-1)

    # Only pad when n is not lane-aligned (<= 127 extra elems); padded values
    # are excluded from the sum by the in-kernel mask.
    lane_rem = n % LANES
    if lane_rem:
        pad = LANES - lane_rem
        o_flat = jnp.pad(o_flat, (0, pad))
        t_flat = jnp.pad(t_flat, (0, pad))

    rows = o_flat.size // LANES
    block_rows = min(DESIRED_BLOCK_ROWS, pl.cdiv(rows, 8) * 8)  # multiple of 8
    total_blocks = pl.cdiv(rows, block_rows)
    blocks_per_core = pl.cdiv(total_blocks, NUM_CORES)

    o2d = o_flat.reshape(rows, LANES)
    t2d = t_flat.reshape(rows, LANES)

    def in_map(c, i):
        # Clamp so the (at most one) redundant step of core 1 re-reads a valid
        # block; its contribution is fully masked out in-kernel.
        return (jnp.minimum(c * blocks_per_core + i, total_blocks - 1), 0)

    kernel = functools.partial(
        _charbonnier_kernel,
        full_rows=n // LANES,
        rem=n % LANES,
        block_rows=block_rows,
        blocks_per_core=blocks_per_core,
        total_blocks=total_blocks,
        eps2=float(epsilon) ** 2,
    )

    partials = pl.pallas_call(
        kernel,
        out_shape=jax.ShapeDtypeStruct((1, NUM_CORES * LANES), jnp.float32),
        grid_spec=pltpu.PrefetchScalarGridSpec(
            num_scalar_prefetch=0,
            grid=(NUM_CORES, blocks_per_core),
            in_specs=[
                pl.BlockSpec((block_rows, LANES), in_map),
                pl.BlockSpec((block_rows, LANES), in_map),
            ],
            # lane-dense per-core partial-sum chunks
            out_specs=pl.BlockSpec((1, LANES), lambda c, i: (0, c)),
        ),
        compiler_params=pltpu.CompilerParams(
            dimension_semantics=("parallel", "arbitrary"),
            vmem_limit_bytes=32 * 1024 * 1024,
        ),
    )(o2d, t2d)

    return (jnp.sum(partials) * (1.0 / n)).astype(outputs.dtype)


if __name__ == "__main__":
    key = jax.random.PRNGKey(0)
    k1, k2 = jax.random.split(key)
    # NCHW-shaped inputs, as the loss would typically be applied to conv outputs
    x_shape = (2, 4, 16, 16)
    outputs = jax.random.normal(k1, x_shape, dtype=jnp.float32)
    targets = jax.random.normal(k2, x_shape, dtype=jnp.float32)

    loss = jax.jit(charbonnier_loss)(outputs, targets)
    jax.block_until_ready(loss)

    # reference check in plain JAX (matches the PyTorch module semantics)
    eps = jnp.float32(1e-6)
    d = outputs - targets
    ref = jnp.mean(jnp.sqrt(d * d + eps * eps))
    assert jnp.allclose(loss, ref, rtol=1e-5, atol=1e-6), (loss, ref)

    print("KERNEL_OK")
</pallas_src>

<mosaic_0001>
module attributes {stable_mosaic.version = 11 : i64} {
  func.func @_charbonnier_kernel(%arg0: i32, %arg1: i32, %arg2: memref<16x128xf32, #tpu.memory_space<vmem>>, %arg3: memref<16x128xf32, #tpu.memory_space<vmem>>, %arg4: memref<1x128xf32, #tpu.memory_space<vmem>>) attributes {dimension_semantics = [#tpu.dimension_semantics<parallel>, #tpu.dimension_semantics<arbitrary>], iteration_bounds = array<i64: 2, 1>, scalar_prefetch = 0 : i64, scratch_operands = 0 : i64, tpu.core_type = #tpu.core_type<tc>, window_params = [{transform_indices = @transform_0, window_bounds = array<i64: 16, 128>}, {transform_indices = @transform_1, window_bounds = array<i64: 16, 128>}, {transform_indices = @transform_2, window_bounds = array<i64: 1, 128>}]} {
    %c0_i32 = arith.constant 0 : i32
    %0 = arith.cmpi eq, %arg1, %c0_i32 : i32
    %1 = arith.extui %0 : i1 to i32
    %c0_i32_0 = arith.constant 0 : i32
    %2 = arith.cmpi ne, %1, %c0_i32_0 : i32
    scf.if %2 {
      %cst_8 = arith.constant 0.000000e+00 : f32
      %18 = vector.broadcast %cst_8 : f32 to vector<1x128xf32>
      %c0_9 = arith.constant 0 : index
      %c0_10 = arith.constant 0 : index
      %19 = vector.load %arg4[%c0_9, %c0_10] : memref<1x128xf32, #tpu.memory_space<vmem>>, vector<1x128xf32>
      tpu.vector_store %arg4[%c0_9, %c0_10], %18 {strides = array<i32>} : memref<1x128xf32, #tpu.memory_space<vmem>>, vector<1x128xf32>,
    } else {
    }
    %c1_i32 = arith.constant 1 : i32
    %3 = arith.muli %arg0, %c1_i32 : i32
    %4 = arith.addi %3, %arg1 : i32
    %c0 = arith.constant 0 : index
    %c0_1 = arith.constant 0 : index
    %5 = vector.load %arg2[%c0, %c0_1] : memref<16x128xf32, #tpu.memory_space<vmem>>, vector<16x128xf32>
    %c0_2 = arith.constant 0 : index
    %c0_3 = arith.constant 0 : index
    %6 = vector.load %arg3[%c0_2, %c0_3] : memref<16x128xf32, #tpu.memory_space<vmem>>, vector<16x128xf32>
    %7 = arith.subf %5, %6 : vector<16x128xf32>
    %8 = arith.mulf %7, %7 : vector<16x128xf32>
    %cst = arith.constant 9.99999996E-13 : f32
    %9 = vector.broadcast %cst : f32 to vector<16x128xf32>
    %10 = arith.addf %8, %9 : vector<16x128xf32>
    %11 = math.sqrt %10 : vector<16x128xf32>
    %c0_i32_4 = arith.constant 0 : i32
    %12 = arith.cmpi slt, %4, %c0_i32_4 : i32
    %13 = arith.extui %12 : i1 to i32
    %c0_i32_5 = arith.constant 0 : i32
    %14 = arith.cmpi ne, %13, %c0_i32_5 : i32
    scf.if %14 {
      %c0_8 = arith.constant 0 : index
      %c0_9 = arith.constant 0 : index
      %18 = vector.load %arg4[%c0_8, %c0_9] : memref<1x128xf32, #tpu.memory_space<vmem>>, vector<1x128xf32>
      %cst_10 = arith.constant dense<0.000000e+00> : vector<128xf32>
      %19 = vector.multi_reduction <add>, %11, %cst_10 [0] : vector<16x128xf32> to vector<128xf32>
      %20 = vector.shape_cast %19 : vector<128xf32> to vector<1x128xf32>
      %21 = arith.addf %18, %20 : vector<1x128xf32>
      %c0_11 = arith.constant 0 : index
      %c0_12 = arith.constant 0 : index
      %22 = vector.load %arg4[%c0_11, %c0_12] : memref<1x128xf32, #tpu.memory_space<vmem>>, vector<1x128xf32>
      tpu.vector_store %arg4[%c0_11, %c0_12], %21 {strides = array<i32>} : memref<1x128xf32, #tpu.memory_space<vmem>>, vector<1x128xf32>,
    } else {
    }
    %c0_i32_6 = arith.constant 0 : i32
    %15 = arith.cmpi sge, %4, %c0_i32_6 : i32
    %16 = arith.extui %15 : i1 to i32
    %c0_i32_7 = arith.constant 0 : i32
    %17 = arith.cmpi ne, %16, %c0_i32_7 : i32
    scf.if %17 {
      %c16_i32 = arith.constant 16 : i32
      %18 = arith.muli %4, %c16_i32 : i32
      %19 = tpu.iota {dimensions = array<i32: 0>} : vector<16x128xi32>
      %20 = tpu.iota {dimensions = array<i32: 1>} : vector<16x128xi32>
      %21 = vector.broadcast %18 : i32 to vector<16x128xi32>
      %22 = arith.addi %21, %19 : vector<16x128xi32>
      %c16_i32_8 = arith.constant 16 : i32
      %23 = vector.broadcast %c16_i32_8 : i32 to vector<16x128xi32>
      %24 = arith.cmpi slt, %22, %23 : vector<16x128xi32>
      %c16_i32_9 = arith.constant 16 : i32
      %25 = vector.broadcast %c16_i32_9 : i32 to vector<16x128xi32>
      %26 = arith.cmpi eq, %22, %25 : vector<16x128xi32>
      %c0_i32_10 = arith.constant 0 : i32
      %27 = vector.broadcast %c0_i32_10 : i32 to vector<16x128xi32>
      %28 = arith.cmpi slt, %20, %27 : vector<16x128xi32>
      %29 = arith.andi %26, %28 : vector<16x128xi1>
      %30 = arith.ori %24, %29 : vector<16x128xi1>
      %cst_11 = arith.constant 0.000000e+00 : f32
      %31 = vector.broadcast %cst_11 : f32 to vector<16x128xf32>
      %32 = arith.select %30, %11, %31 : vector<16x128xi1>, vector<16x128xf32>
      %c0_12 = arith.constant 0 : index
      %c0_13 = arith.constant 0 : index
      %33 = vector.load %arg4[%c0_12, %c0_13] : memref<1x128xf32, #tpu.memory_space<vmem>>, vector<1x128xf32>
      %cst_14 = arith.constant dense<0.000000e+00> : vector<128xf32>
      %34 = vector.multi_reduction <add>, %32, %cst_14 [0] : vector<16x128xf32> to vector<128xf32>
      %35 = vector.shape_cast %34 : vector<128xf32> to vector<1x128xf32>
      %36 = arith.addf %33, %35 : vector<1x128xf32>
      %c0_15 = arith.constant 0 : index
      %c0_16 = arith.constant 0 : index
      %37 = vector.load %arg4[%c0_15, %c0_16] : memref<1x128xf32, #tpu.memory_space<vmem>>, vector<1x128xf32>
      tpu.vector_store %arg4[%c0_15, %c0_16], %36 {strides = array<i32>} : memref<1x128xf32, #tpu.memory_space<vmem>>, vector<1x128xf32>,
    } else {
    }
    return
  }
  func.func @transform_0(%arg0: i32, %arg1: i32) -> (i32, i32) {
    %c1_i32 = arith.constant 1 : i32
    %0 = arith.muli %arg0, %c1_i32 : i32
    %1 = arith.addi %0, %arg1 : i32
    %c0_i32 = arith.constant 0 : i32
    %2 = arith.minsi %1, %c0_i32 : i32
    %c0_i32_0 = arith.constant 0 : i32
    %c0_i32_1 = arith.constant 0 : i32
    return %2, %c0_i32_0 : i32, i32
  }
  func.func @transform_1(%arg0: i32, %arg1: i32) -> (i32, i32) {
    %c1_i32 = arith.constant 1 : i32
    %0 = arith.muli %arg0, %c1_i32 : i32
    %1 = arith.addi %0, %arg1 : i32
    %c0_i32 = arith.constant 0 : i32
    %2 = arith.minsi %1, %c0_i32 : i32
    %c0_i32_0 = arith.constant 0 : i32
    %c0_i32_1 = arith.constant 0 : i32
    return %2, %c0_i32_0 : i32, i32
  }
  func.func @transform_2(%arg0: i32, %arg1: i32) -> (i32, i32) {
    %c0_i32 = arith.constant 0 : i32
    %c0_i32_0 = arith.constant 0 : i32
    return %c0_i32, %arg0 : i32, i32
  }
}

</mosaic_0001>

<llo_original>
// kernel: charbonnier_loss.1
$region0: #{charbonnier_loss.1}
  #allocation0 [shape = 'u32[]', space=smem, size = 0x4, offset = 0x4, fixed_abs, tag = 'smem constant byte address 0x4 - core index']
  #allocation1 [shape = 'u32[144,128]{1,0:T(1,128)}', space=vmem, size = 0x12000, scoped, tag = 'internal scratch']
  %s0 = inlined_call_operand.vmem [shape: f32[16,128], index: 0, kind: input, shape index: {}]
  %s1 = inlined_call_operand.vmem [shape: f32[16,128], index: 1, kind: input, shape index: {}]
  %s2 = inlined_call_operand.vmem [shape: f32[1,256], index: 2, kind: output, shape index: {}]
  %s3 = sld [smem:[#allocation0]]
  $region53: #{charbonnier_loss.1} parent=0
    _
  %s5 = ssub.s32 1, %s3
  %s6 = scalar_select 0, %s5, %s3
  loop: start=0, step=1, limit=4
  $region2: #{charbonnier_loss.1} parent=0 // loop_pre_header
    _
  $region3: #{charbonnier_loss.1} parent=0 // loop_header
    %s8 = sphi 0, %s12
    %p9 = scmp.ge.s32.totalorder %s8, 4
    %s15 = sphi 0, %s27
    %s16 = sphi 0, %s23
    %s17 = sphi 0, %s15
    %s18 = sphi 0, %s16
    %s19 = sphi 0, %s17
    %s20 = sphi 0, %s18
    %s36 = sphi 0, %s38
    %s39 = sphi 0, %s36
    %s40 = sphi 0, %s39
    %s56 = sphi 0, %s40
    %s68 = sphi 0, %s70
    %s71 = sphi 0, %s68
    %s72 = sphi 0, %s71
    %s88 = sphi 0, %s72
    %s94 = sphi 0, %s96
    %s97 = sphi 0, %s94
    %s98 = sphi 0, %s97
    %s114 = sphi 0, %s98
  $region4: #{charbonnier_loss.1} parent=0 // loop_header_branch
    %11 = sbr.rel (%p9) target = $region8
  $region5: #{charbonnier_loss.1} parent=0 // loop_body
    %s13 = ssub.s32 %s8, 1
    %s14 = ssub.s32 %s8, 2
    %s21 = sadd.s32 1, %s16
    %p22 = scmp.ge.s32.totalorder %s21, 1
    %s23 = scalar_select %p22, 0, %s21
    %s24 = sadd.s32 1, %s15
    %s25 = scalar_select %p22, %s24, %s15
    %p26 = scmp.ge.s32.totalorder %s25, 2
    %s27 = scalar_select %p26, 0, %s25
    %s28 = sadd.s32 %s15, %s16
    %p29 = scmp.lt.s32.totalorder %s28, 0
    %s30 = scalar_select %p29, %s28, 0
    %s31 = sadd.s32 %s27, %s23
    %p32 = scmp.lt.s32.totalorder %s31, 0
    %s33 = scalar_select %p32, %s31, 0
    %s34 = ssub.s32 %s30, %s33
    %p35 = scmp.eq.s32.totalorder %s34, 0
    %s37 = sadd.s32 %s36, 1
    %s38 = scalar_select %p35, %s36, %s37
    %p41 = pneg %p35
    %p42 = scmp.eq.s32.totalorder %s8, 1
    %p43 = por %p41, %p42
    %p44 = scmp.ne.s32.totalorder %s36, %s39
    %p45 = scmp.eq.s32.totalorder %s8, 0
    %p46 = por %p44, %p45
    %p47 = scmp.ne.s32.totalorder %s36, %s39
    %p48 = scmp.eq.s32.totalorder %s13, 1
    %p49 = por %p47, %p48
    %p50 = scmp.ne.s32.totalorder %s39, %s40
    %p51 = scmp.eq.s32.totalorder %s13, 0
    %p52 = por %p50, %p51
    %p53 = scmp.ne.s32.totalorder %s39, %s40
    %p54 = scmp.eq.s32.totalorder %s14, 1
    %p55 = por %p53, %p54
    %p57 = scmp.ne.s32.totalorder %s40, %s56
    %p58 = scmp.eq.s32.totalorder %s14, 0
    %p59 = por %p57, %p58
    %s60 = sadd.s32 %s15, %s16
    %p61 = scmp.lt.s32.totalorder %s60, 0
    %s62 = scalar_select %p61, %s60, 0
    %s63 = sadd.s32 %s27, %s23
    %p64 = scmp.lt.s32.totalorder %s63, 0
    %s65 = scalar_select %p64, %s63, 0
    %s66 = ssub.s32 %s62, %s65
    %p67 = scmp.eq.s32.totalorder %s66, 0
    %s69 = sadd.s32 %s68, 1
    %s70 = scalar_select %p67, %s68, %s69
    %p73 = pneg %p67
    %p74 = scmp.eq.s32.totalorder %s8, 1
    %p75 = por %p73, %p74
    %p76 = scmp.ne.s32.totalorder %s68, %s71
    %p77 = scmp.eq.s32.totalorder %s8, 0
    %p78 = por %p76, %p77
    %p79 = scmp.ne.s32.totalorder %s68, %s71
    %p80 = scmp.eq.s32.totalorder %s13, 1
    %p81 = por %p79, %p80
    %p82 = scmp.ne.s32.totalorder %s71, %s72
    %p83 = scmp.eq.s32.totalorder %s13, 0
    %p84 = por %p82, %p83
    %p85 = scmp.ne.s32.totalorder %s71, %s72
    %p86 = scmp.eq.s32.totalorder %s14, 1
    %p87 = por %p85, %p86
    %p89 = scmp.ne.s32.totalorder %s72, %s88
    %p90 = scmp.eq.s32.totalorder %s14, 0
    %p91 = por %p89, %p90
    %s92 = ssub.s32 %s15, %s27
    %p93 = scmp.eq.s32.totalorder %s92, 0
    %s95 = sadd.s32 %s94, 1
    %s96 = scalar_select %p93, %s94, %s95
    %p99 = pneg %p93
    %p100 = scmp.eq.s32.totalorder %s8, 1
    %p101 = por %p99, %p100
    %p102 = scmp.ne.s32.totalorder %s94, %s97
    %p103 = scmp.eq.s32.totalorder %s8, 0
    %p104 = por %p102, %p103
    %p105 = scmp.ne.s32.totalorder %s94, %s97
    %p106 = scmp.eq.s32.totalorder %s13, 1
    %p107 = por %p105, %p106
    %p108 = scmp.ne.s32.totalorder %s97, %s98
    %p109 = scmp.eq.s32.totalorder %s13, 0
    %p110 = por %p108, %p109
    %p111 = scmp.ne.s32.totalorder %s97, %s98
    %p112 = scmp.eq.s32.totalorder %s14, 1
    %p113 = por %p111, %p112
    %p115 = scmp.ne.s32.totalorder %s98, %s114
    %p116 = scmp.eq.s32.totalorder %s14, 0
    %p117 = por %p115, %p116
    %p118 = scmp.le.s32.totalorder 1, %s8
    %p119 = scmp.lt.s32.totalorder %s8, 3
    %p120 = pnand %p118, %p119
    %p121 = pneg %p120
    // Predicated region
    $region9: #{charbonnier_loss.1} parent=5 // pred_check
      _
    $region10: #{charbonnier_loss.1} parent=5 // pred_check_branch
      %123 = sbr.rel (%p120) target = $region12
    $region11: #{charbonnier_loss.1} parent=5 // pred_region
      %s124 = ssub.s32 %s8, 1
    $region12: #{charbonnier_loss.1} parent=5 // pred_fallthru
      _
    %p125 = scmp.lt.s32.totalorder %s8, 2
    // Predicated region
    $region13: #{charbonnier_loss.1} parent=5 // pred_check
      %p126 = pneg %p125
    $region14: #{charbonnier_loss.1} parent=5 // pred_check_branch
      %128 = sbr.rel (%p126) target = $region16
    $region15: #{charbonnier_loss.1} parent=5 // pred_region
      // Predicated region
      $region17: #{charbonnier_loss.1} parent=15 // pred_check
        %p129 = pneg %p46
      $region18: #{charbonnier_loss.1} parent=15 // pred_check_branch
        %131 = sbr.rel (%p129) target = $region20
      $region19: #{charbonnier_loss.1} parent=15 // pred_region
        %s132 = sadd.s32 %s15, %s16
        %p133 = scmp.lt.s32.totalorder %s132, 0
        %s134 = scalar_select %p133, %s132, 0
        %s135 = smul.u32 2, %s134
        %p136 = scmp.lt.s32.totalorder %s135, 1
        %s137 = scalar_select %p136, %s135, 1
        %s138 = smul.addr %s137, 8
        %s139 = scalar_lea.vmem %s0, %s138
        %s140 = sadd.s32 %s15, %s16
        %p141 = scmp.lt.s32.totalorder %s140, 0
        %s142 = scalar_select %p141, %s140, 0
        %s143 = smul.u32 2, %s142
      $region20: #{charbonnier_loss.1} parent=15 // pred_fallthru
        _
      // Predicated region
      $region21: #{charbonnier_loss.1} parent=15 // pred_check
        %p144 = pneg %p78
      $region22: #{charbonnier_loss.1} parent=15 // pred_check_branch
        %146 = sbr.rel (%p144) target = $region24
      $region23: #{charbonnier_loss.1} parent=15 // pred_region
        %s147 = sadd.s32 %s15, %s16
        %p148 = scmp.lt.s32.totalorder %s147, 0
        %s149 = scalar_select %p148, %s147, 0
        %s150 = smul.u32 2, %s149
        %p151 = scmp.lt.s32.totalorder %s150, 1
        %s152 = scalar_select %p151, %s150, 1
        %s153 = smul.addr %s152, 8
        %s154 = scalar_lea.vmem %s1, %s153
        %s155 = sadd.s32 %s15, %s16
        %p156 = scmp.lt.s32.totalorder %s155, 0
        %s157 = scalar_select %p156, %s155, 0
        %s158 = smul.u32 2, %s157
      $region24: #{charbonnier_loss.1} parent=15 // pred_fallthru
        _
    $region16: #{charbonnier_loss.1} parent=5 // pred_fallthru
      _
    %p159 = scmp.le.s32.totalorder 1, %s8
    %p160 = scmp.lt.s32.totalorder %s8, 3
    %p161 = pnand %p159, %p160
    %p162 = pneg %p161
    // Predicated region
    $region25: #{charbonnier_loss.1} parent=5 // pred_check
      _
    $region26: #{charbonnier_loss.1} parent=5 // pred_check_branch
      %164 = sbr.rel (%p161) target = $region28
    $region27: #{charbonnier_loss.1} parent=5 // pred_region
      %s165 = ssub.s32 %s8, 1
      %s166 = sadd.s32 %s17, %s18
      %p167 = scmp.lt.s32.totalorder %s166, 0
      %s168 = scalar_select %p167, %s166, 0
      %s169 = smul.u32 2, %s168
      %p170 = scmp.lt.s32.totalorder %s169, 1
      %s171 = scalar_select %p170, %s169, 1
      %s172 = smul.addr %s171, 8
      %s173 = scalar_lea.vmem %s0, %s172
      %p174 = pneg %p52
      %p175 = pneg %p49
      %s176 = sadd.s32 %s17, %s18
      %p177 = scmp.lt.s32.totalorder %s176, 0
      %s178 = scalar_select %p177, %s176, 0
      %s179 = smul.u32 2, %s178
      %p180 = scmp.lt.s32.totalorder %s179, 1
      %s181 = scalar_select %p180, %s179, 1
      %s182 = smul.addr %s181, 8
      %s183 = scalar_lea.vmem %s1, %s182
      %p184 = pneg %p84
      %p185 = pneg %p81
      %p186 = pneg %p110
      %p187 = pneg %p107
      %p188 = scmp.lt.s32.totalorder %s17, 1
      %s189 = scalar_select %p188, %s17, 1
      %s190 = scalar_lea.vmem %s2, %s189
      %s191 = sadd.s32 %s17, %s18
      %p192 = scmp.lt.s32.totalorder %s191, 0
      %s193 = scalar_select %p192, %s191, 0
      %s194 = smul.u32 2, %s193
      %p195 = scmp.lt.s32.totalorder %s194, 1
      %s196 = scalar_select %p195, %s194, 1
      %s197 = smul.addr %s196, 8
      %s198 = scalar_lea.vmem %s0, %s197
      %s199 = sadd.s32 %s17, %s18
      %p200 = scmp.lt.s32.totalorder %s199, 0
      %s201 = scalar_select %p200, %s199, 0
      %s202 = smul.u32 2, %s201
      %s203 = sadd.s32 %s17, %s18
      %p204 = scmp.lt.s32.totalorder %s203, 0
      %s205 = scalar_select %p204, %s203, 0
      %s206 = smul.u32 2, %s205
      %p207 = scmp.lt.s32.totalorder %s206, 1
      %s208 = scalar_select %p207, %s206, 1
      %s209 = smul.addr %s208, 8
      %s210 = scalar_lea.vmem %s1, %s209
      %s211 = sadd.s32 %s17, %s18
      %p212 = scmp.lt.s32.totalorder %s211, 0
      %s213 = scalar_select %p212, %s211, 0
      %s214 = smul.u32 2, %s213
      %p215 = scmp.lt.s32.totalorder %s17, 1
      %s216 = scalar_select %p215, %s17, 1
      %s217 = scalar_lea.vmem %s2, %s216
      %p218 = scmp.eq.s32.totalorder %s18, 0
      // Predicated region
      $region29: #{charbonnier_loss.1} parent=27 // pred_check
        %p219 = pneg %p218
      $region30: #{charbonnier_loss.1} parent=27 // pred_check_branch
        %221 = sbr.rel (%p219) target = $region32
      $region31: #{charbonnier_loss.1} parent=27 // pred_region
        %222 = vst [vmem:[%s217] sm:$0x1] 0.0
      $region32: #{charbonnier_loss.1} parent=27 // pred_fallthru
        _
      %s223 = sadd.s32 %s17, %s18
      %v224 = vld [vmem:[%s198] sm:$0xff]
      %v225 = vld [vmem:[%s198 + $0x8] sm:$0xff]
      %v226 = vld [vmem:[%s210] sm:$0xff]
      %v227 = vld [vmem:[%s210 + $0x8] sm:$0xff]
      %v228 = vsub.f32 %v224, %v226
      %v229 = vsub.f32 %v225, %v227
      %v230 = vmul.f32 %v228, %v228
      %v231 = vmul.f32 %v229, %v229
      %v232 = vadd.f32 %v230, 1e-12
      %v233 = vadd.f32 %v231, 1e-12
      %v234 = vrsqrt.pop %v232
      %v235 = vmul.f32 %v232, %v234
      %vm236 = vcmp.eq.f32.partialorder %v232, inf
      %v237 = vsel %vm236, %v232, %v235
      %vm238 = vcmp.eq.f32.partialorder %v232, 0.0
      %v239 = vand.u32 %v232, 2147483648
      %v240 = vsel %vm238, %v239, %v237
      %v241 = vrsqrt.pop %v233
      %v242 = vmul.f32 %v233, %v241
      %vm243 = vcmp.eq.f32.partialorder %v233, inf
      %v244 = vsel %vm243, %v233, %v242
      %vm245 = vcmp.eq.f32.partialorder %v233, 0.0
      %v246 = vand.u32 %v233, 2147483648
      %v247 = vsel %vm245, %v246, %v244
      %p248 = scmp.lt.s32.totalorder %s223, 0
      // Predicated region
      $region33: #{charbonnier_loss.1} parent=27 // pred_check
        %p249 = pneg %p248
      $region34: #{charbonnier_loss.1} parent=27 // pred_check_branch
        %251 = sbr.rel (%p249) target = $region36
      $region35: #{charbonnier_loss.1} parent=27 // pred_region
        %v252 = vld [vmem:[%s217] sm:$0x1]
        %v253 = vadd.f32 %v240, %v247
        %v254 = vrot.slane %v253, 4
        %v255 = vadd.f32 %v253, %v254
        %v256 = vrot.slane %v255, 2
        %v257 = vadd.f32 %v255, %v256
        %v258 = vrot.slane %v257, 1
        %v259 = vadd.f32 %v257, %v258
        %v260 = vadd.f32 %v252, %v259
        %261 = vst [vmem:[%s217] sm:$0x1] %v260
      $region36: #{charbonnier_loss.1} parent=27 // pred_fallthru
        _
      %p262 = scmp.ge.s32.totalorder %s223, 0
      // Predicated region
      $region37: #{charbonnier_loss.1} parent=27 // pred_check
        %p263 = pneg %p262
      $region38: #{charbonnier_loss.1} parent=27 // pred_check_branch
        %265 = sbr.rel (%p263) target = $region40
      $region39: #{charbonnier_loss.1} parent=27 // pred_region
        %s266 = smul.u32 %s223, 16
        %v267 = vlaneseq
        %v268 = vshrl.u32 %v267, 7
        %v269 = vadd.s32 %v268, 8
        %v270 = vlaneseq
        %v271 = vand.u32 %v270, 127
        %v272 = vstv %s266
        %v273 = vadd.s32 %v272, %v268
        %v274 = vadd.s32 %v272, %v269
        %vm275 = vcmp.lt.s32.totalorder %v273, 16
        %vm276 = vcmp.lt.s32.totalorder %v274, 16
        %vm277 = vcmp.eq.s32.totalorder %v273, 16
        %vm278 = vcmp.eq.s32.totalorder %v274, 16
        %vm279 = vcmp.lt.s32.totalorder %v271, 0
        %vm280 = vmand %vm277, %vm279
        %vm281 = vmand %vm278, %vm279
        %vm282 = vmor %vm275, %vm280
        %vm283 = vmor %vm276, %vm281
        %v284 = vsel %vm282, %v240, 0.0
        %v285 = vsel %vm283, %v247, 0.0
        %v286 = vld [vmem:[%s217] sm:$0x1]
        %v287 = vadd.f32 %v284, %v285
        %v288 = vrot.slane %v287, 4
        %v289 = vadd.f32 %v287, %v288
        %v290 = vrot.slane %v289, 2
        %v291 = vadd.f32 %v289, %v290
        %v292 = vrot.slane %v291, 1
        %v293 = vadd.f32 %v291, %v292
        %v294 = vadd.f32 %v286, %v293
        %295 = vst [vmem:[%s217] sm:$0x1] %v294
      $region40: #{charbonnier_loss.1} parent=27 // pred_fallthru
        _
      %p296 = scmp.lt.s32.totalorder %s17, 1
      %s297 = scalar_select %p296, %s17, 1
      %s298 = scalar_lea.vmem %s2, %s297
      // Predicated region
      $region41: #{charbonnier_loss.1} parent=27 // pred_check
        %p299 = pneg %p107
      $region42: #{charbonnier_loss.1} parent=27 // pred_check_branch
        %301 = sbr.rel (%p299) target = $region44
      $region43: #{charbonnier_loss.1} parent=27 // pred_region
        _
      $region44: #{charbonnier_loss.1} parent=27 // pred_fallthru
        _
    $region28: #{charbonnier_loss.1} parent=5 // pred_fallthru
      _
    %p302 = scmp.le.s32.totalorder 2, %s8
    // Predicated region
    $region45: #{charbonnier_loss.1} parent=5 // pred_check
      %p303 = pneg %p302
    $region46: #{charbonnier_loss.1} parent=5 // pred_check_branch
      %305 = sbr.rel (%p303) target = $region48
    $region47: #{charbonnier_loss.1} parent=5 // pred_region
      %s306 = ssub.s32 %s8, 2
      // Predicated region
      $region49: #{charbonnier_loss.1} parent=47 // pred_check
        %p307 = pneg %p113
      $region50: #{charbonnier_loss.1} parent=47 // pred_check_branch
        %309 = sbr.rel (%p307) target = $region52
      $region51: #{charbonnier_loss.1} parent=47 // pred_region
        %p310 = scmp.lt.s32.totalorder %s19, 1
        %s311 = scalar_select %p310, %s19, 1
        %s312 = scalar_lea.vmem %s2, %s311
      $region52: #{charbonnier_loss.1} parent=47 // pred_fallthru
        _
    $region48: #{charbonnier_loss.1} parent=5 // pred_fallthru
      _
  $region6: #{charbonnier_loss.1} parent=0 // loop_footer
    %s12 = sadd.s32 1, %s8
  $region7: #{charbonnier_loss.1} parent=0 // loop_footer_branch
    %7 = sbr.rel target = $region3
  $region8: #{charbonnier_loss.1} parent=0 // loop_exit
    _

</llo_original>
